<compile_context>
chip_gen: v5e
topology: v5e:2x2
jax: 0.10.0
libtpu: 0.0.40
codegen_flags: <defaults>
</compile_context>

<pallas_src>
import jax
import jax.numpy as jnp
from jax.experimental import pallas as pl
from jax.experimental.pallas import tpu as pltpu

LAYER_NORM_EPS = 1e-12


def _label_layernorm_kernel(w_ref, g_ref, b_ref, o_ref):
    # w_ref: (L_TILE, H) slice of the embedding table.
    # g_ref/b_ref: (1, H) LayerNorm affine params.
    # o_ref: (L_TILE, H) normalized output slice.
    w = w_ref[...].astype(jnp.float32)                            # (Lt, H)
    g = g_ref[...].astype(jnp.float32)                            # (1, H)
    b = b_ref[...].astype(jnp.float32)                            # (1, H)
    mean = jnp.mean(w, axis=-1, keepdims=True)                    # (Lt, 1)
    centered = w - mean
    # Biased variance, centered form (matches BertLayerNorm).  Per-row only —
    # never reduce across rows, so a padded partial last block stays harmless.
    var = jnp.mean(centered * centered, axis=-1, keepdims=True)   # (Lt, 1)
    inv = jax.lax.rsqrt(var + LAYER_NORM_EPS)
    out = centered * inv * g + b
    # TODO(synk): dropout is identity in eval mode; training-mode dropout not emulated.
    o_ref[...] = out.astype(o_ref.dtype)


def _round_up(x, m):
    return ((x + m - 1) // m) * m


def _pick_l_tile(L, H, in_dtype, out_dtype, budget_bytes=10 * 1024 * 1024):
    """Bytes-budget-driven row tile.

    Budget accounts for double-buffered input + output blocks plus ~3 f32
    block-sized temporaries the LN math materializes, so the per-step scoped
    VMEM stays under v5e's 16 MiB default and well inside v7x's 64 MiB chip.
    """
    in_b = jnp.dtype(in_dtype).itemsize
    out_b = jnp.dtype(out_dtype).itemsize
    per_row = H * (2 * in_b + 2 * out_b + 3 * 4)
    # Sublane granularity: bf16/8-bit packing wants 16-row multiples, f32 wants 8.
    sub = 16 if min(in_b, out_b) < 4 else 8
    rows = max((budget_bytes // per_row) // sub * sub, sub)
    # Ensure >= 2 grid steps whenever L allows so both v7x TensorCores get work
    # (and the DMA / per-step overhead is split) under "parallel" semantics.
    if L > sub:
        rows = min(rows, _round_up(-(-L // 2), sub))
    # Never exceed L; if the result equals L it is the "full dim" block, which
    # is always layout-legal regardless of divisibility.
    return min(rows, L)


def normalize_label_table(word_emb_weight, gamma, beta, out_dtype=jnp.bfloat16):
    """LayerNorm over the hidden axis of the [label_size, hidden] table.

    Runs the Pallas kernel once; call this at weight-load / after weight
    updates and cache the result — the forward pass only needs a broadcast.
    For lane-dense (unmasked) stores, hidden should be a multiple of 128
    (BERT's 768/1024 are fine); other H still works but hits masked stores.
    """
    L, H = word_emb_weight.shape
    gamma2 = gamma.reshape(1, H)
    beta2 = beta.reshape(1, H)

    l_tile = _pick_l_tile(L, H, word_emb_weight.dtype, out_dtype)
    num_steps = pl.cdiv(L, l_tile)

    # Streamed-once input with very small tiles exposes DMA latency / per-step
    # overhead; deepen the pipeline only in that regime.
    table_spec_kwargs = {}
    if l_tile < 256 and num_steps >= 4:
        table_spec_kwargs["pipeline_mode"] = pl.Buffered(3)

    return pl.pallas_call(
        _label_layernorm_kernel,
        out_shape=jax.ShapeDtypeStruct((L, H), out_dtype),
        grid_spec=pltpu.PrefetchScalarGridSpec(
            num_scalar_prefetch=0,
            grid=(num_steps,),
            in_specs=[
                pl.BlockSpec((l_tile, H), lambda i: (i, 0), **table_spec_kwargs),
                pl.BlockSpec((1, H), lambda i: (0, 0)),   # gamma
                pl.BlockSpec((1, H), lambda i: (0, 0)),   # beta
            ],
            out_specs=pl.BlockSpec((l_tile, H), lambda i: (i, 0)),
        ),
        compiler_params=pltpu.CompilerParams(
            dimension_semantics=("parallel",)),
    )(word_emb_weight, gamma2, beta2)


def bert_embeddings_label(input_ids, word_emb_weight, gamma, beta,
                          out_dtype=jnp.bfloat16, precomputed_table=None,
                          materialize_batch=True):
    """Functional forward.  If `precomputed_table` is given the kernel is skipped.

    The batch expand is a lazy jnp.broadcast_to (XLA fuses it into consumers);
    set materialize_batch=False to get the [L, H] table directly when the
    downstream op does not need the dense [B, L, H] copy.
    """
    table = precomputed_table
    if table is None:
        table = normalize_label_table(word_emb_weight, gamma, beta, out_dtype)
    if not materialize_batch:
        return table
    batch = input_ids.shape[0]
    L, H = table.shape
    return jnp.broadcast_to(table[None, :, :], (batch, L, H))


class BertEmbeddingsLabelTPU:
    """Module-style wrapper: the normalized table is computed once and cached;
    each forward call is just a (lazy) batch broadcast."""

    def __init__(self, word_emb_weight, gamma, beta, out_dtype=jnp.bfloat16):
        self.out_dtype = out_dtype
        self.update_weights(word_emb_weight, gamma, beta)

    def update_weights(self, word_emb_weight, gamma, beta):
        self.table = normalize_label_table(word_emb_weight, gamma, beta, self.out_dtype)

    def __call__(self, input_ids):
        batch = input_ids.shape[0]
        L, H = self.table.shape
        return jnp.broadcast_to(self.table[None, :, :], (batch, L, H))


def _reference(word_emb_weight, gamma, beta, batch):
    w = word_emb_weight.astype(jnp.float32)
    mean = jnp.mean(w, axis=-1, keepdims=True)
    var = jnp.mean((w - mean) ** 2, axis=-1, keepdims=True)
    normed = (w - mean) / jnp.sqrt(var + LAYER_NORM_EPS)
    out = normed * gamma.astype(jnp.float32) + beta.astype(jnp.float32)
    return jnp.broadcast_to(out[None], (batch,) + out.shape)


if __name__ == "__main__":
    key = jax.random.PRNGKey(0)
    k_w1, k_ids, k_w2 = jax.random.split(key, 3)

    # ---- Test 1: small config matching the module (f32 output, tight check).
    batch, seq_len, label_size, hidden = 2, 8, 16, 32
    word_emb_weight = 0.02 * jax.random.normal(
        k_w1, (label_size, hidden), dtype=jnp.float32)
    gamma = jnp.ones((hidden,), dtype=jnp.float32)
    beta = jnp.zeros((hidden,), dtype=jnp.float32)
    input_ids = jax.random.randint(
        k_ids, (batch, seq_len), 0, label_size, dtype=jnp.int32)

    out = bert_embeddings_label(input_ids, word_emb_weight, gamma, beta,
                                out_dtype=jnp.float32)
    out = jax.block_until_ready(out)
    ref = _reference(word_emb_weight, gamma, beta, batch)
    assert out.shape == (batch, label_size, hidden)
    assert jnp.allclose(out, ref, atol=1e-5, rtol=1e-5)

    # ---- Test 2: tiled path (L not divisible by the tile), lane-dense H
    #      (multiple of 128), bf16 default output via the cached-table class.
    label_size2, hidden2 = 264, 128
    word_emb_weight2 = 0.02 * jax.random.normal(
        k_w2, (label_size2, hidden2), dtype=jnp.float32)
    gamma2 = 1.0 + 0.1 * jnp.arange(hidden2, dtype=jnp.float32) / hidden2
    beta2 = 0.01 * jnp.arange(hidden2, dtype=jnp.float32)

    module = BertEmbeddingsLabelTPU(word_emb_weight2, gamma2, beta2)  # kernel runs once here
    out2 = jax.block_until_ready(module(input_ids))
    ref2 = _reference(word_emb_weight2, gamma2, beta2, batch)
    assert out2.dtype == jnp.bfloat16
    assert out2.shape == (batch, label_size2, hidden2)
    assert jnp.allclose(out2.astype(jnp.float32), ref2, atol=5e-2, rtol=5e-2)

    print("KERNEL_OK")
</pallas_src>

<mosaic_0001>
module attributes {stable_mosaic.version = 11 : i64} {
  func.func @_label_layernorm_kernel(%arg0: i32, %arg1: memref<8x32xf32, #tpu.memory_space<vmem>>, %arg2: memref<1x32xf32, #tpu.memory_space<vmem>>, %arg3: memref<1x32xf32, #tpu.memory_space<vmem>>, %arg4: memref<8x32xf32, #tpu.memory_space<vmem>>) attributes {dimension_semantics = [#tpu.dimension_semantics<parallel>], iteration_bounds = array<i64: 2>, scalar_prefetch = 0 : i64, scratch_operands = 0 : i64, tpu.core_type = #tpu.core_type<tc>, window_params = [{transform_indices = @transform_0, window_bounds = array<i64: 8, 32>}, {pipeline_mode = #tpu.pipeline_mode<synchronous>, transform_indices = @transform_1, window_bounds = array<i64: 1, 32>}, {pipeline_mode = #tpu.pipeline_mode<synchronous>, transform_indices = @transform_2, window_bounds = array<i64: 1, 32>}, {transform_indices = @transform_3, window_bounds = array<i64: 8, 32>}]} {
    %c0 = arith.constant 0 : index
    %c0_0 = arith.constant 0 : index
    %0 = vector.load %arg1[%c0, %c0_0] : memref<8x32xf32, #tpu.memory_space<vmem>>, vector<8x32xf32>
    %c0_1 = arith.constant 0 : index
    %c0_2 = arith.constant 0 : index
    %1 = vector.load %arg2[%c0_1, %c0_2] : memref<1x32xf32, #tpu.memory_space<vmem>>, vector<1x32xf32>
    %c0_3 = arith.constant 0 : index
    %c0_4 = arith.constant 0 : index
    %2 = vector.load %arg3[%c0_3, %c0_4] : memref<1x32xf32, #tpu.memory_space<vmem>>, vector<1x32xf32>
    %cst = arith.constant dense<0.000000e+00> : vector<8xf32>
    %3 = vector.multi_reduction <add>, %0, %cst [1] : vector<8x32xf32> to vector<8xf32>
    %4 = vector.shape_cast %3 : vector<8xf32> to vector<8x1xf32>
    %cst_5 = arith.constant 3.200000e+01 : f32
    %5 = vector.broadcast %cst_5 : f32 to vector<8x1xf32>
    %6 = arith.divf %4, %5 : vector<8x1xf32>
    %7 = vector.broadcast %6 : vector<8x1xf32> to vector<8x32xf32>
    %8 = arith.subf %0, %7 : vector<8x32xf32>
    %9 = arith.mulf %8, %8 : vector<8x32xf32>
    %cst_6 = arith.constant dense<0.000000e+00> : vector<8xf32>
    %10 = vector.multi_reduction <add>, %9, %cst_6 [1] : vector<8x32xf32> to vector<8xf32>
    %11 = vector.shape_cast %10 : vector<8xf32> to vector<8x1xf32>
    %cst_7 = arith.constant 3.200000e+01 : f32
    %12 = vector.broadcast %cst_7 : f32 to vector<8x1xf32>
    %13 = arith.divf %11, %12 : vector<8x1xf32>
    %cst_8 = arith.constant 9.99999996E-13 : f32
    %14 = vector.broadcast %cst_8 : f32 to vector<8x1xf32>
    %15 = arith.addf %13, %14 : vector<8x1xf32>
    %16 = math.rsqrt %15 : vector<8x1xf32>
    %17 = vector.broadcast %16 : vector<8x1xf32> to vector<8x32xf32>
    %18 = arith.mulf %8, %17 : vector<8x32xf32>
    %19 = vector.broadcast %1 : vector<1x32xf32> to vector<8x32xf32>
    %20 = arith.mulf %18, %19 : vector<8x32xf32>
    %21 = vector.broadcast %2 : vector<1x32xf32> to vector<8x32xf32>
    %22 = arith.addf %20, %21 : vector<8x32xf32>
    %c0_9 = arith.constant 0 : index
    %c0_10 = arith.constant 0 : index
    %23 = vector.load %arg4[%c0_9, %c0_10] : memref<8x32xf32, #tpu.memory_space<vmem>>, vector<8x32xf32>
    tpu.vector_store %arg4[%c0_9, %c0_10], %22 {strides = array<i32>} : memref<8x32xf32, #tpu.memory_space<vmem>>, vector<8x32xf32>,
    return
  }
  func.func @transform_0(%arg0: i32) -> (i32, i32) {
    %c0_i32 = arith.constant 0 : i32
    %c0_i32_0 = arith.constant 0 : i32
    return %arg0, %c0_i32 : i32, i32
  }
  func.func @transform_1(%arg0: i32) -> (i32, i32) {
    %c0_i32 = arith.constant 0 : i32
    %c0_i32_0 = arith.constant 0 : i32
    %c0_i32_1 = arith.constant 0 : i32
    return %c0_i32, %c0_i32_0 : i32, i32
  }
  func.func @transform_2(%arg0: i32) -> (i32, i32) {
    %c0_i32 = arith.constant 0 : i32
    %c0_i32_0 = arith.constant 0 : i32
    %c0_i32_1 = arith.constant 0 : i32
    return %c0_i32, %c0_i32_0 : i32, i32
  }
  func.func @transform_3(%arg0: i32) -> (i32, i32) {
    %c0_i32 = arith.constant 0 : i32
    %c0_i32_0 = arith.constant 0 : i32
    return %arg0, %c0_i32 : i32, i32
  }
}

</mosaic_0001>

<llo_original>
// kernel: tpu_custom_call.1
$region0: #{tpu_custom_call.1}
  #allocation0 [shape = 'u32[]', space=smem, size = 0x4, offset = 0x4, fixed_abs, tag = 'smem constant byte address 0x4 - core index']
  #allocation1 [shape = 'u32[72,128]{1,0:T(1,128)}', space=vmem, size = 0x9000, scoped, tag = 'internal scratch']
  %s0 = inlined_call_operand.hbm [shape: f32[16,32], index: 0, kind: input, shape index: {}]
  %s1 = inlined_call_operand.hbm [shape: f32[1,32], index: 1, kind: input, shape index: {}]
  %s2 = inlined_call_operand.vmem [shape: f32[1,32], index: 2, kind: input, shape index: {}]
  %s3 = inlined_call_operand.hbm [shape: f32[16,32], index: 3, kind: output, shape index: {}]
  %s4 = sld [smem:[#allocation0]]
  $region53: #{tpu_custom_call.1} parent=0
    _
  %s6 = ssub.s32 1, %s4
  %s7 = scalar_select 0, %s6, %s4
  $region1: #{tpu_custom_call.1} parent=0
    #allocation2 [shape = 'u8[8192]{0}', space=vmem, size = 0x2000, scoped, tag = 'input window, operand 0']
    #allocation3 [shape = 's32[2]{0}', space=sflag, size = 0x8, scoped, tag = 'scoped memory for tpu_custom_call.1']
    #allocation4 [shape = 's32[2]{0}', space=sflag, size = 0x8, scoped, tag = 'scoped memory for tpu_custom_call.1']
    #allocation5 [shape = 'u8[512]{0}', space=vmem, size = 0x400, scoped, tag = 'input window, operand 1, single buffered']
    #allocation6 [shape = 's32[1]{0}', space=sflag, size = 0x4, scoped, tag = 'scoped memory for tpu_custom_call.1']
    #allocation7 [shape = 'u8[8192]{0}', space=vmem, size = 0x2000, scoped, tag = 'output window, operand 0']
    %8 = vsyncpa [#allocation3], 0
    %s9 = scalar_lea.sflag [#allocation3], 1
    %10 = vsyncpa %s9, 0
    %11 = vsyncpa [#allocation6], 0
    %12 = vsyncpa [#allocation4], 0
    %s13 = scalar_lea.sflag [#allocation4], 1
    %14 = vsyncpa %s13, 0
    loop: start=0, step=1, limit=4
    $region2: #{tpu_custom_call.1} parent=1 // loop_pre_header
      _
    $region3: #{tpu_custom_call.1} parent=1 // loop_header
      %s16 = sphi 0, %s20
      %p17 = scmp.ge.s32.totalorder %s16, 4
      %s26 = sphi 0, %s28
      %s29 = sphi 0, %s26
      %s30 = sphi 0, %s29
      %s46 = sphi 0, %s30
      %s50 = sphi 0, %s50
      %s52 = sphi 0, %s50
      %s53 = sphi 0, %s52
      %s67 = sphi 0, %s53
      %s71 = sphi 0, %s71
      %s73 = sphi 0, %s71
      %s74 = sphi 0, %s73
      %s88 = sphi 0, %s74
      %s94 = sphi 0, %s96
      %s97 = sphi 0, %s94
      %s98 = sphi 0, %s97
      %s114 = sphi 0, %s98
    $region4: #{tpu_custom_call.1} parent=1 // loop_header_branch
      %19 = sbr.rel (%p17) target = $region8
    $region5: #{tpu_custom_call.1} parent=1 // loop_body
      %s21 = ssub.s32 %s16, 1
      %s22 = ssub.s32 %s16, 2
      %s23 = sadd.s32 %s16, 1
      %s24 = ssub.s32 %s16, %s23
      %p25 = scmp.eq.s32.totalorder %s24, 0
      %s27 = sadd.s32 %s26, 1
      %s28 = scalar_select %p25, %s26, %s27
      %p31 = pneg %p25
      %p32 = scmp.eq.s32.totalorder %s16, 1
      %p33 = por %p31, %p32
      %p34 = scmp.ne.s32.totalorder %s26, %s29
      %p35 = scmp.eq.s32.totalorder %s16, 0
      %p36 = por %p34, %p35
      %p37 = scmp.ne.s32.totalorder %s26, %s29
      %p38 = scmp.eq.s32.totalorder %s21, 1
      %p39 = por %p37, %p38
      %p40 = scmp.ne.s32.totalorder %s29, %s30
      %p41 = scmp.eq.s32.totalorder %s21, 0
      %p42 = por %p40, %p41
      %p43 = scmp.ne.s32.totalorder %s29, %s30
      %p44 = scmp.eq.s32.totalorder %s22, 1
      %p45 = por %p43, %p44
      %p47 = scmp.ne.s32.totalorder %s30, %s46
      %p48 = scmp.eq.s32.totalorder %s22, 0
      %p49 = por %p47, %p48
      %s51 = sadd.s32 %s50, 1
      %p54 = scmp.eq.s32.totalorder %s16, 1
      %p55 = scmp.ne.s32.totalorder %s50, %s52
      %p56 = scmp.eq.s32.totalorder %s16, 0
      %p57 = por %p55, %p56
      %p58 = scmp.ne.s32.totalorder %s50, %s52
      %p59 = scmp.eq.s32.totalorder %s21, 1
      %p60 = por %p58, %p59
      %p61 = scmp.ne.s32.totalorder %s52, %s53
      %p62 = scmp.eq.s32.totalorder %s21, 0
      %p63 = por %p61, %p62
      %p64 = scmp.ne.s32.totalorder %s52, %s53
      %p65 = scmp.eq.s32.totalorder %s22, 1
      %p66 = por %p64, %p65
      %p68 = scmp.ne.s32.totalorder %s53, %s67
      %p69 = scmp.eq.s32.totalorder %s22, 0
      %p70 = por %p68, %p69
      %s72 = sadd.s32 %s71, 1
      %p75 = scmp.eq.s32.totalorder %s16, 1
      %p76 = scmp.ne.s32.totalorder %s71, %s73
      %p77 = scmp.eq.s32.totalorder %s16, 0
      %p78 = por %p76, %p77
      %p79 = scmp.ne.s32.totalorder %s71, %s73
      %p80 = scmp.eq.s32.totalorder %s21, 1
      %p81 = por %p79, %p80
      %p82 = scmp.ne.s32.totalorder %s73, %s74
      %p83 = scmp.eq.s32.totalorder %s21, 0
      %p84 = por %p82, %p83
      %p85 = scmp.ne.s32.totalorder %s73, %s74
      %p86 = scmp.eq.s32.totalorder %s22, 1
      %p87 = por %p85, %p86
      %p89 = scmp.ne.s32.totalorder %s74, %s88
      %p90 = scmp.eq.s32.totalorder %s22, 0
      %p91 = por %p89, %p90
      %s92 = ssub.s32 %s16, %s23
      %p93 = scmp.eq.s32.totalorder %s92, 0
      %s95 = sadd.s32 %s94, 1
      %s96 = scalar_select %p93, %s94, %s95
      %p99 = pneg %p93
      %p100 = scmp.eq.s32.totalorder %s16, 1
      %p101 = por %p99, %p100
      %p102 = scmp.ne.s32.totalorder %s94, %s97
      %p103 = scmp.eq.s32.totalorder %s16, 0
      %p104 = por %p102, %p103
      %p105 = scmp.ne.s32.totalorder %s94, %s97
      %p106 = scmp.eq.s32.totalorder %s21, 1
      %p107 = por %p105, %p106
      %p108 = scmp.ne.s32.totalorder %s97, %s98
      %p109 = scmp.eq.s32.totalorder %s21, 0
      %p110 = por %p108, %p109
      %p111 = scmp.ne.s32.totalorder %s97, %s98
      %p112 = scmp.eq.s32.totalorder %s22, 1
      %p113 = por %p111, %p112
      %p115 = scmp.ne.s32.totalorder %s98, %s114
      %p116 = scmp.eq.s32.totalorder %s22, 0
      %p117 = por %p115, %p116
      %p118 = scmp.le.s32.totalorder 1, %s16
      %p119 = scmp.lt.s32.totalorder %s16, 3
      %p120 = pnand %p118, %p119
      %p121 = pneg %p120
      // Predicated region
      $region9: #{tpu_custom_call.1} parent=5 // pred_check
        _
      $region10: #{tpu_custom_call.1} parent=5 // pred_check_branch
        %123 = sbr.rel (%p120) target = $region12
      $region11: #{tpu_custom_call.1} parent=5 // pred_region
        %s124 = ssub.s32 %s16, 1
        // Predicated region
        $region13: #{tpu_custom_call.1} parent=11 // pred_check
          %p125 = pneg %p63
        $region14: #{tpu_custom_call.1} parent=11 // pred_check_branch
          %127 = sbr.rel (%p125) target = $region16
        $region15: #{tpu_custom_call.1} parent=11 // pred_region
          %129 = vsyncadd [#allocation6], 0
          %s131 = sshll.u32 %s1, 4
          %s132 = int_to_ptr.hbm [resolvable:$true] %s131
          %s133 = sshll.u32 [#allocation5], 4
          %s134 = int_to_ptr.vmem [resolvable:$true] %s133
          %136 = dma.hbm_to_vmem [thread:$0]  %s132, 16, %s134, [#allocation6]
        $region16: #{tpu_custom_call.1} parent=11 // pred_fallthru
          _
        // Predicated region
        $region17: #{tpu_custom_call.1} parent=11 // pred_check
          %p137 = pneg %p84
        $region18: #{tpu_custom_call.1} parent=11 // pred_check_branch
          %139 = sbr.rel (%p137) target = $region20
        $region19: #{tpu_custom_call.1} parent=11 // pred_region
          _
        $region20: #{tpu_custom_call.1} parent=11 // pred_fallthru
          _
      $region12: #{tpu_custom_call.1} parent=5 // pred_fallthru
        _
      %p140 = scmp.lt.s32.totalorder %s16, 2
      // Predicated region
      $region21: #{tpu_custom_call.1} parent=5 // pred_check
        %p141 = pneg %p140
      $region22: #{tpu_custom_call.1} parent=5 // pred_check_branch
        %143 = sbr.rel (%p141) target = $region24
      $region23: #{tpu_custom_call.1} parent=5 // pred_region
        // Predicated region
        $region25: #{tpu_custom_call.1} parent=23 // pred_check
          %p144 = pneg %p36
        $region26: #{tpu_custom_call.1} parent=23 // pred_check_branch
          %146 = sbr.rel (%p144) target = $region28
        $region27: #{tpu_custom_call.1} parent=23 // pred_region
          %s147 = sand.u32 %s26, 1
          %s148 = scalar_lea.sflag [#allocation3], %s147
          %s149 = sand.u32 %s26, 1
          %s150 = smul.addr %s149, 8
          %s151 = scalar_lea.vmem [#allocation2], %s150
          %153 = vsyncadd %s148, 0
          %s154 = smul.addr %s16, 8
          %s155 = scalar_lea.hbm %s0, %s154
          %s157 = sshll.u32 %s155, 4
          %s158 = int_to_ptr.hbm [resolvable:$true] %s157
          %s159 = sshll.u32 %s151, 4
          %s160 = int_to_ptr.vmem [resolvable:$true] %s159
          %162 = dma.hbm_to_vmem [thread:$0]  %s158, 128, %s160, %s148
        $region28: #{tpu_custom_call.1} parent=23 // pred_fallthru
          _
      $region24: #{tpu_custom_call.1} parent=5 // pred_fallthru
        _
      %p163 = scmp.le.s32.totalorder 1, %s16
      %p164 = scmp.lt.s32.totalorder %s16, 3
      %p165 = pnand %p163, %p164
      %p166 = pneg %p165
      // Predicated region
      $region29: #{tpu_custom_call.1} parent=5 // pred_check
        _
      $region30: #{tpu_custom_call.1} parent=5 // pred_check_branch
        %168 = sbr.rel (%p165) target = $region32
      $region31: #{tpu_custom_call.1} parent=5 // pred_region
        %s169 = ssub.s32 %s16, 1
        %s170 = sand.u32 %s29, 1
        %s171 = scalar_lea.sflag [#allocation3], %s170
        %s172 = sand.u32 %s29, 1
        %s173 = smul.addr %s172, 8
        %s174 = scalar_lea.vmem [#allocation2], %s173
        // Predicated region
        $region33: #{tpu_custom_call.1} parent=31 // pred_check
          %p175 = pneg %p42
        $region34: #{tpu_custom_call.1} parent=31 // pred_check_branch
          %177 = sbr.rel (%p175) target = $region36
        $region35: #{tpu_custom_call.1} parent=31 // pred_region
          %179 = dma.done %s171, 128
        $region36: #{tpu_custom_call.1} parent=31 // pred_fallthru
          _
        // Predicated region
        $region37: #{tpu_custom_call.1} parent=31 // pred_check
          %p180 = pneg %p63
        $region38: #{tpu_custom_call.1} parent=31 // pred_check_branch
          %182 = sbr.rel (%p180) target = $region40
        $region39: #{tpu_custom_call.1} parent=31 // pred_region
          %184 = dma.done [#allocation6], 16
        $region40: #{tpu_custom_call.1} parent=31 // pred_fallthru
          _
        %s185 = sand.u32 %s29, 1
        %s186 = scalar_lea.sflag [#allocation3], %s185
        %s187 = sand.u32 %s29, 1
        %s188 = smul.addr %s187, 8
        %s189 = scalar_lea.vmem [#allocation2], %s188
        %p190 = pneg %p42
        %p191 = pneg %p39
        %p192 = pneg %p63
        %p193 = pneg %p60
        %p194 = pneg %p84
        %p195 = pneg %p81
        %p196 = pneg %p110
        %p197 = pneg %p107
        %s198 = sand.u32 %s97, 1
        %s199 = scalar_lea.sflag [#allocation4], %s198
        %s200 = sand.u32 %s97, 1
        %s201 = smul.addr %s200, 8
        %s202 = scalar_lea.vmem [#allocation7], %s201
        %v203 = vld [vmem:[%s174] sm:$0xff]
        %v204 = vld [vmem:[#allocation5] sm:$0x1]
        %v205 = vld [vmem:[%s2] sm:$0x1]
        %vm206 = vcmask 261120
        %v207 = vsel %vm206, %v203, 0.0
        %208 = vadd.xlane.f32.xlu0 %v207
        %v209 = vpop.xlane.xlu0 %208
        %v210 = vrcp.pop 32.0
        %v211 = vmul.f32 32.0, %v210
        %v212 = vsub.f32 1.0, %v211
        %v213 = vmul.f32 %v210, %v212
        %v214 = vadd.f32 %v210, %v213
        %vm215 = vweird.f32 %v210
        %v216 = vsel %vm215, %v210, %v214
        %v217 = vmul.f32 %v209, %v216
        %v218 = vsub.f32 %v203, %v217
        %v219 = vmul.f32 %v218, %v218
        %v220 = vsel %vm206, %v219, 0.0
        %221 = vadd.xlane.f32.xlu0 %v220
        %v222 = vpop.xlane.xlu0 %221
        %v223 = vmul.f32 %v222, %v216
        %v224 = vadd.f32 %v223, 1e-12
        %v225 = vrsqrt.pop %v224
        %v226 = vmul.f32 %v225, %v224
        %v227 = vmul.f32 %v226, %v225
        %v228 = vmul.f32 0.5, %v227
        %v229 = vsub.f32 1.5, %v228
        %v230 = vmul.f32 %v225, %v229
        %vm231 = vweird.f32 %v224
        %vm232 = vweird.f32 %v225
        %vm233 = vmor %vm231, %vm232
        %v234 = vsel %vm233, %v225, %v230
        %v235 = vmul.f32 %v218, %v234
        %v237 = vperm.slane %v204, 0
        %v239 = vmul.f32 %v235, %v237
        %v241 = vperm.slane %v205, 0
        %v243 = vadd.f32 %v239, %v241
        %244 = vst.msk [vmem:[%s202] sm:$0xff] %vm206, %v243
        %s245 = sand.u32 %s97, 1
        %s246 = scalar_lea.sflag [#allocation4], %s245
        %s247 = sand.u32 %s97, 1
        %s248 = smul.addr %s247, 8
        %s249 = scalar_lea.vmem [#allocation7], %s248
        // Predicated region
        $region41: #{tpu_custom_call.1} parent=31 // pred_check
          %p250 = pneg %p107
        $region42: #{tpu_custom_call.1} parent=31 // pred_check_branch
          %252 = sbr.rel (%p250) target = $region44
        $region43: #{tpu_custom_call.1} parent=31 // pred_region
          %254 = vsyncadd %s246, 0
          %s255 = smul.addr %s21, 8
          %s256 = scalar_lea.hbm %s3, %s255
          %s258 = sshll.u32 %s249, 4
          %s259 = int_to_ptr.vmem [resolvable:$true] %s258
          %s260 = sshll.u32 %s256, 4
          %s261 = int_to_ptr.hbm [resolvable:$true] %s260
          %263 = dma.vmem_to_hbm [thread:$0]  %s259, 128, %s261, %s246
        $region44: #{tpu_custom_call.1} parent=31 // pred_fallthru
          _
      $region32: #{tpu_custom_call.1} parent=5 // pred_fallthru
        _
      %p264 = scmp.le.s32.totalorder 2, %s16
      // Predicated region
      $region45: #{tpu_custom_call.1} parent=5 // pred_check
        %p265 = pneg %p264
      $region46: #{tpu_custom_call.1} parent=5 // pred_check_branch
        %267 = sbr.rel (%p265) target = $region48
      $region47: #{tpu_custom_call.1} parent=5 // pred_region
        %s268 = ssub.s32 %s16, 2
        // Predicated region
        $region49: #{tpu_custom_call.1} parent=47 // pred_check
          %p269 = pneg %p113
        $region50: #{tpu_custom_call.1} parent=47 // pred_check_branch
          %271 = sbr.rel (%p269) target = $region52
        $region51: #{tpu_custom_call.1} parent=47 // pred_region
          %s272 = sand.u32 %s98, 1
          %s273 = scalar_lea.sflag [#allocation4], %s272
          %s274 = sand.u32 %s98, 1
          %s275 = smul.addr %s274, 8
          %s276 = scalar_lea.vmem [#allocation7], %s275
          %278 = dma.done %s273, 128
        $region52: #{tpu_custom_call.1} parent=47 // pred_fallthru
          _
      $region48: #{tpu_custom_call.1} parent=5 // pred_fallthru
        _
    $region6: #{tpu_custom_call.1} parent=1 // loop_footer
      %s20 = sadd.s32 1, %s16
    $region7: #{tpu_custom_call.1} parent=1 // loop_footer_branch
      %15 = sbr.rel target = $region3
    $region8: #{tpu_custom_call.1} parent=1 // loop_exit
      _
    %279 = vsyncpa [#allocation3], 1
    %s280 = scalar_lea.sflag [#allocation3], 1
    %281 = vsyncpa %s280, 1
    %282 = vsyncpa [#allocation6], 1
    %283 = vsyncpa [#allocation4], 1
    %s284 = scalar_lea.sflag [#allocation4], 1
    %285 = vsyncpa %s284, 1

</llo_original>
